<compile_context>
chip_gen: v6e
topology: v6e:2x2x1
jax: 0.10.0
libtpu: 0.0.40
codegen_flags: <defaults>
</compile_context>

<pallas_src>
import jax
import jax.numpy as jnp
from jax import lax
from jax.experimental import pallas as pl
from jax.experimental.pallas import tpu as pltpu


# ----------------------------- Pallas kernel --------------------------------

def _biasfree_layernorm_kernel(x_ref, w_ref, o_ref):
    # x: (br, C) in I/O dtype, w: (1, C) f32, o: (br, C) in I/O dtype
    x = x_ref[...].astype(jnp.float32)
    mu = jnp.mean(x, axis=-1, keepdims=True)
    ex2 = jnp.mean(x * x, axis=-1, keepdims=True)
    # One-pass variance; clamp guards the E[x^2]-E[x]^2 cancellation corner case.
    var = jnp.maximum(ex2 - mu * mu, 0.0)
    inv = lax.rsqrt(var + 1e-5)                         # EUP rsqrt (free slot)
    # NOTE: x (not x - mu) — BiasFree variant divides the raw input.
    o_ref[...] = (x * inv * w_ref[...]).astype(o_ref.dtype)


# ----------------------------- wrapper ---------------------------------------

def biasfree_layernorm(x, weight, *, block_rows=4096,
                       vmem_budget_bytes=12 * 1024 * 1024):
    """BiasFree LayerNorm over the last dim of x. weight: (C,), kept in f32."""
    C = x.shape[-1]
    lead = x.shape[:-1]
    x2 = x.reshape(-1, C)
    N = x2.shape[0]
    itemsize = jnp.dtype(x.dtype).itemsize

    if N <= 8:
        # Single block whose dims equal the full array dims (no (8,128) constraint).
        br = N
    else:
        # Cap rows so 2x(in) + 2x(out) double buffers stay under the budget
        # (v5e scoped-VMEM default is only 16 MiB; v6e/v7x default to 32 MiB).
        cap = max(8, (vmem_budget_bytes // (4 * C * itemsize)) // 8 * 8)
        br = max(8, (min(block_rows, cap, N) // 8) * 8)
        # Give the grid >= ~4 steps when possible so v7x's two TensorCores both
        # get work and each core still has >= 2 steps to double-buffer.
        min_steps = 4
        if pl.cdiv(N, br) < min_steps:
            br = max(8, (pl.cdiv(N, min_steps) // 8) * 8)

    grid = (pl.cdiv(N, br),)   # ragged last block: no pad, OOB writes dropped

    out = pl.pallas_call(
        _biasfree_layernorm_kernel,
        out_shape=jax.ShapeDtypeStruct((N, C), x.dtype),
        grid=grid,
        in_specs=[
            pl.BlockSpec((br, C), lambda i: (i, 0)),
            pl.BlockSpec((1, C), lambda i: (0, 0)),    # weight resident across grid
        ],
        out_specs=pl.BlockSpec((br, C), lambda i: (i, 0)),
        compiler_params=pltpu.CompilerParams(
            dimension_semantics=("parallel",),         # shard rows across TCs (v7x)
        ),
    )(x2, weight.reshape(1, C).astype(jnp.float32))

    return out.reshape(*lead, C)


# ----------------------------- main ------------------------------------------

if __name__ == "__main__":
    key = jax.random.PRNGKey(0)
    kx, kw = jax.random.split(key)

    # Tokens from a 2 x (16*16) feature map, C = 128 channels (lane-dense stores).
    B, HW, C = 2, 16 * 16, 128
    x = jax.random.normal(kx, (B, HW, C), jnp.float32)
    # Module initializes weight to ones; perturb slightly so the multiply is exercised.
    weight = 1.0 + 0.1 * jax.random.normal(kw, (C,), jnp.float32)

    out = biasfree_layernorm(x, weight)
    out = jax.block_until_ready(out)

    # Reference (pure JAX) check of the BiasFree semantics.
    mu = jnp.mean(x, axis=-1, keepdims=True)
    var = jnp.mean((x - mu) ** 2, axis=-1, keepdims=True)
    ref = x / jnp.sqrt(var + 1e-5) * weight

    assert out.shape == x.shape
    assert bool(jnp.all(jnp.isfinite(out)))
    assert bool(jnp.allclose(out, ref, atol=1e-5, rtol=1e-5))
    print("KERNEL_OK")
</pallas_src>

<mosaic_0001>
module attributes {stable_mosaic.version = 11 : i64} {
  func.func @_biasfree_layernorm_kernel(%arg0: i32, %arg1: memref<128x128xf32, #tpu.memory_space<vmem>>, %arg2: memref<1x128xf32, #tpu.memory_space<vmem>>, %arg3: memref<128x128xf32, #tpu.memory_space<vmem>>) attributes {dimension_semantics = [#tpu.dimension_semantics<parallel>], iteration_bounds = array<i64: 4>, scalar_prefetch = 0 : i64, scratch_operands = 0 : i64, tpu.core_type = #tpu.core_type<tc>, window_params = [{transform_indices = @transform_0, window_bounds = array<i64: 128, 128>}, {pipeline_mode = #tpu.pipeline_mode<synchronous>, transform_indices = @transform_1, window_bounds = array<i64: 1, 128>}, {transform_indices = @transform_2, window_bounds = array<i64: 128, 128>}]} {
    %c0 = arith.constant 0 : index
    %c0_0 = arith.constant 0 : index
    %0 = vector.load %arg1[%c0, %c0_0] : memref<128x128xf32, #tpu.memory_space<vmem>>, vector<128x128xf32>
    %cst = arith.constant dense<0.000000e+00> : vector<128xf32>
    %1 = vector.multi_reduction <add>, %0, %cst [1] : vector<128x128xf32> to vector<128xf32>
    %2 = vector.shape_cast %1 : vector<128xf32> to vector<128x1xf32>
    %cst_1 = arith.constant 1.280000e+02 : f32
    %3 = vector.broadcast %cst_1 : f32 to vector<128x1xf32>
    %4 = arith.divf %2, %3 : vector<128x1xf32>
    %5 = arith.mulf %0, %0 : vector<128x128xf32>
    %cst_2 = arith.constant dense<0.000000e+00> : vector<128xf32>
    %6 = vector.multi_reduction <add>, %5, %cst_2 [1] : vector<128x128xf32> to vector<128xf32>
    %7 = vector.shape_cast %6 : vector<128xf32> to vector<128x1xf32>
    %cst_3 = arith.constant 1.280000e+02 : f32
    %8 = vector.broadcast %cst_3 : f32 to vector<128x1xf32>
    %9 = arith.divf %7, %8 : vector<128x1xf32>
    %10 = arith.mulf %4, %4 : vector<128x1xf32>
    %11 = arith.subf %9, %10 : vector<128x1xf32>
    %cst_4 = arith.constant 0.000000e+00 : f32
    %12 = vector.broadcast %cst_4 : f32 to vector<128x1xf32>
    %13 = arith.maximumf %11, %12 : vector<128x1xf32>
    %cst_5 = arith.constant 9.99999974E-6 : f32
    %14 = vector.broadcast %cst_5 : f32 to vector<128x1xf32>
    %15 = arith.addf %13, %14 : vector<128x1xf32>
    %16 = math.rsqrt %15 : vector<128x1xf32>
    %17 = vector.broadcast %16 : vector<128x1xf32> to vector<128x128xf32>
    %18 = arith.mulf %0, %17 : vector<128x128xf32>
    %c0_6 = arith.constant 0 : index
    %c0_7 = arith.constant 0 : index
    %19 = vector.load %arg2[%c0_6, %c0_7] : memref<1x128xf32, #tpu.memory_space<vmem>>, vector<1x128xf32>
    %20 = vector.broadcast %19 : vector<1x128xf32> to vector<128x128xf32>
    %21 = arith.mulf %18, %20 : vector<128x128xf32>
    %c0_8 = arith.constant 0 : index
    %c0_9 = arith.constant 0 : index
    %22 = vector.load %arg3[%c0_8, %c0_9] : memref<128x128xf32, #tpu.memory_space<vmem>>, vector<128x128xf32>
    tpu.vector_store %arg3[%c0_8, %c0_9], %21 {strides = array<i32>} : memref<128x128xf32, #tpu.memory_space<vmem>>, vector<128x128xf32>,
    return
  }
  func.func @transform_0(%arg0: i32) -> (i32, i32) {
    %c0_i32 = arith.constant 0 : i32
    %c0_i32_0 = arith.constant 0 : i32
    return %arg0, %c0_i32 : i32, i32
  }
  func.func @transform_1(%arg0: i32) -> (i32, i32) {
    %c0_i32 = arith.constant 0 : i32
    %c0_i32_0 = arith.constant 0 : i32
    %c0_i32_1 = arith.constant 0 : i32
    return %c0_i32, %c0_i32_0 : i32, i32
  }
  func.func @transform_2(%arg0: i32) -> (i32, i32) {
    %c0_i32 = arith.constant 0 : i32
    %c0_i32_0 = arith.constant 0 : i32
    return %arg0, %c0_i32 : i32, i32
  }
}

</mosaic_0001>

<llo_original>
// kernel: tpu_custom_call.1
$region0: #{tpu_custom_call.1}
  #allocation0 [shape = 'u32[]', space=smem, size = 0x4, offset = 0x4, fixed_abs, tag = 'smem constant byte address 0x4 - core index']
  #allocation1 [shape = 'u32[144,128]{1,0:T(1,128)}', space=vmem, size = 0x12000, scoped, tag = 'internal scratch']
  %s0 = inlined_call_operand.hbm [shape: f32[512,128], index: 0, kind: input, shape index: {}]
  %s1 = inlined_call_operand.vmem [shape: f32[1,128], index: 1, kind: input, shape index: {}]
  %s2 = inlined_call_operand.hbm [shape: f32[512,128], index: 2, kind: output, shape index: {}]
  %s3 = sld [smem:[#allocation0]]
  $region45: #{tpu_custom_call.1} parent=0
    _
  %s5 = ssub.s32 1, %s3
  %s6 = scalar_select 0, %s5, %s3
  $region1: #{tpu_custom_call.1} parent=0
    #allocation2 [shape = 'u8[131072]{0}', space=vmem, size = 0x20000, scoped, tag = 'input window, operand 0']
    #allocation3 [shape = 's32[2]{0}', space=sflag, size = 0x8, scoped, tag = 'scoped memory for tpu_custom_call.1']
    #allocation4 [shape = 's32[2]{0}', space=sflag, size = 0x8, scoped, tag = 'scoped memory for tpu_custom_call.1']
    #allocation5 [shape = 'u8[131072]{0}', space=vmem, size = 0x20000, scoped, tag = 'output window, operand 0']
    %7 = vsyncpa [#allocation3], 0
    %s8 = scalar_lea.sflag [#allocation3], 1
    %9 = vsyncpa %s8, 0
    %10 = vsyncpa [#allocation4], 0
    %s11 = scalar_lea.sflag [#allocation4], 1
    %12 = vsyncpa %s11, 0
    loop: start=0, step=1, limit=6
    $region2: #{tpu_custom_call.1} parent=1 // loop_pre_header
      _
    $region3: #{tpu_custom_call.1} parent=1 // loop_header
      %s14 = sphi 0, %s18
      %p15 = scmp.ge.s32.totalorder %s14, 6
      %s24 = sphi 0, %s26
      %s27 = sphi 0, %s24
      %s28 = sphi 0, %s27
      %s44 = sphi 0, %s28
      %s48 = sphi 0, %s48
      %s50 = sphi 0, %s48
      %s51 = sphi 0, %s50
      %s65 = sphi 0, %s51
      %s71 = sphi 0, %s73
      %s74 = sphi 0, %s71
      %s75 = sphi 0, %s74
      %s91 = sphi 0, %s75
    $region4: #{tpu_custom_call.1} parent=1 // loop_header_branch
      %17 = sbr.rel (%p15) target = $region8
    $region5: #{tpu_custom_call.1} parent=1 // loop_body
      %s19 = ssub.s32 %s14, 1
      %s20 = ssub.s32 %s14, 2
      %s21 = sadd.s32 %s14, 1
      %s22 = ssub.s32 %s14, %s21
      %p23 = scmp.eq.s32.totalorder %s22, 0
      %s25 = sadd.s32 %s24, 1
      %s26 = scalar_select %p23, %s24, %s25
      %p29 = pneg %p23
      %p30 = scmp.eq.s32.totalorder %s14, 3
      %p31 = por %p29, %p30
      %p32 = scmp.ne.s32.totalorder %s24, %s27
      %p33 = scmp.eq.s32.totalorder %s14, 0
      %p34 = por %p32, %p33
      %p35 = scmp.ne.s32.totalorder %s24, %s27
      %p36 = scmp.eq.s32.totalorder %s19, 3
      %p37 = por %p35, %p36
      %p38 = scmp.ne.s32.totalorder %s27, %s28
      %p39 = scmp.eq.s32.totalorder %s19, 0
      %p40 = por %p38, %p39
      %p41 = scmp.ne.s32.totalorder %s27, %s28
      %p42 = scmp.eq.s32.totalorder %s20, 3
      %p43 = por %p41, %p42
      %p45 = scmp.ne.s32.totalorder %s28, %s44
      %p46 = scmp.eq.s32.totalorder %s20, 0
      %p47 = por %p45, %p46
      %s49 = sadd.s32 %s48, 1
      %p52 = scmp.eq.s32.totalorder %s14, 3
      %p53 = scmp.ne.s32.totalorder %s48, %s50
      %p54 = scmp.eq.s32.totalorder %s14, 0
      %p55 = por %p53, %p54
      %p56 = scmp.ne.s32.totalorder %s48, %s50
      %p57 = scmp.eq.s32.totalorder %s19, 3
      %p58 = por %p56, %p57
      %p59 = scmp.ne.s32.totalorder %s50, %s51
      %p60 = scmp.eq.s32.totalorder %s19, 0
      %p61 = por %p59, %p60
      %p62 = scmp.ne.s32.totalorder %s50, %s51
      %p63 = scmp.eq.s32.totalorder %s20, 3
      %p64 = por %p62, %p63
      %p66 = scmp.ne.s32.totalorder %s51, %s65
      %p67 = scmp.eq.s32.totalorder %s20, 0
      %p68 = por %p66, %p67
      %s69 = ssub.s32 %s14, %s21
      %p70 = scmp.eq.s32.totalorder %s69, 0
      %s72 = sadd.s32 %s71, 1
      %s73 = scalar_select %p70, %s71, %s72
      %p76 = pneg %p70
      %p77 = scmp.eq.s32.totalorder %s14, 3
      %p78 = por %p76, %p77
      %p79 = scmp.ne.s32.totalorder %s71, %s74
      %p80 = scmp.eq.s32.totalorder %s14, 0
      %p81 = por %p79, %p80
      %p82 = scmp.ne.s32.totalorder %s71, %s74
      %p83 = scmp.eq.s32.totalorder %s19, 3
      %p84 = por %p82, %p83
      %p85 = scmp.ne.s32.totalorder %s74, %s75
      %p86 = scmp.eq.s32.totalorder %s19, 0
      %p87 = por %p85, %p86
      %p88 = scmp.ne.s32.totalorder %s74, %s75
      %p89 = scmp.eq.s32.totalorder %s20, 3
      %p90 = por %p88, %p89
      %p92 = scmp.ne.s32.totalorder %s75, %s91
      %p93 = scmp.eq.s32.totalorder %s20, 0
      %p94 = por %p92, %p93
      %p95 = scmp.le.s32.totalorder 1, %s14
      %p96 = scmp.lt.s32.totalorder %s14, 5
      %p97 = pnand %p95, %p96
      %p98 = pneg %p97
      // Predicated region
      $region9: #{tpu_custom_call.1} parent=5 // pred_check
        _
      $region10: #{tpu_custom_call.1} parent=5 // pred_check_branch
        %100 = sbr.rel (%p97) target = $region12
      $region11: #{tpu_custom_call.1} parent=5 // pred_region
        %s101 = ssub.s32 %s14, 1
        // Predicated region
        $region13: #{tpu_custom_call.1} parent=11 // pred_check
          %p102 = pneg %p61
        $region14: #{tpu_custom_call.1} parent=11 // pred_check_branch
          %104 = sbr.rel (%p102) target = $region16
        $region15: #{tpu_custom_call.1} parent=11 // pred_region
          _
        $region16: #{tpu_custom_call.1} parent=11 // pred_fallthru
          _
      $region12: #{tpu_custom_call.1} parent=5 // pred_fallthru
        _
      %p105 = scmp.lt.s32.totalorder %s14, 4
      // Predicated region
      $region17: #{tpu_custom_call.1} parent=5 // pred_check
        %p106 = pneg %p105
      $region18: #{tpu_custom_call.1} parent=5 // pred_check_branch
        %108 = sbr.rel (%p106) target = $region20
      $region19: #{tpu_custom_call.1} parent=5 // pred_region
        // Predicated region
        $region21: #{tpu_custom_call.1} parent=19 // pred_check
          %p109 = pneg %p34
        $region22: #{tpu_custom_call.1} parent=19 // pred_check_branch
          %111 = sbr.rel (%p109) target = $region24
        $region23: #{tpu_custom_call.1} parent=19 // pred_region
          %s112 = sand.u32 %s24, 1
          %s113 = scalar_lea.sflag [#allocation3], %s112
          %s114 = sand.u32 %s24, 1
          %s115 = smul.addr %s114, 128
          %s116 = scalar_lea.vmem [#allocation2], %s115
          %s117 = smul.u32 16, %s14
          %s119 = ssub.s32 2048, 2048
          %120 = vsyncadd %s113, %s119
          %s121 = smul.addr %s117, 128
          %s122 = scalar_lea.hbm %s0, %s121
          %s123 = sshll.u32 %s116, 4
          %s124 = int_to_ptr.vmem [resolvable:$true] %s123
          %129 = dma.hbm_to_vmem [thread:$0]  %s122, 2048, %s124, %s113, 128, 128, 8
        $region24: #{tpu_custom_call.1} parent=19 // pred_fallthru
          _
      $region20: #{tpu_custom_call.1} parent=5 // pred_fallthru
        _
      %p130 = scmp.le.s32.totalorder 1, %s14
      %p131 = scmp.lt.s32.totalorder %s14, 5
      %p132 = pnand %p130, %p131
      %p133 = pneg %p132
      // Predicated region
      $region25: #{tpu_custom_call.1} parent=5 // pred_check
        _
      $region26: #{tpu_custom_call.1} parent=5 // pred_check_branch
        %135 = sbr.rel (%p132) target = $region28
      $region27: #{tpu_custom_call.1} parent=5 // pred_region
        %s136 = ssub.s32 %s14, 1
        %s137 = sand.u32 %s27, 1
        %s138 = scalar_lea.sflag [#allocation3], %s137
        %s139 = sand.u32 %s27, 1
        %s140 = smul.addr %s139, 128
        %s141 = scalar_lea.vmem [#allocation2], %s140
        // Predicated region
        $region29: #{tpu_custom_call.1} parent=27 // pred_check
          %p142 = pneg %p40
        $region30: #{tpu_custom_call.1} parent=27 // pred_check_branch
          %144 = sbr.rel (%p142) target = $region32
        $region31: #{tpu_custom_call.1} parent=27 // pred_region
          %145 = dma.done %s138, 2048
        $region32: #{tpu_custom_call.1} parent=27 // pred_fallthru
          _
        %s146 = sand.u32 %s27, 1
        %s147 = scalar_lea.sflag [#allocation3], %s146
        %s148 = sand.u32 %s27, 1
        %s149 = smul.addr %s148, 128
        %s150 = scalar_lea.vmem [#allocation2], %s149
        %p151 = pneg %p40
        %p152 = pneg %p37
        %p153 = pneg %p61
        %p154 = pneg %p58
        %p155 = pneg %p87
        %p156 = pneg %p84
        %s157 = sand.u32 %s74, 1
        %s158 = scalar_lea.sflag [#allocation4], %s157
        %s159 = sand.u32 %s74, 1
        %s160 = smul.addr %s159, 128
        %s161 = scalar_lea.vmem [#allocation5], %s160
        %s162 = smul.u32 16, %s19
        %s163 = smul.u32 16, %s19
        %v164 = vld [vmem:[%s141] sm:$0xff]
        %v165 = vld [vmem:[%s141 + $0x8] sm:$0xff]
        %v166 = vld [vmem:[%s141 + $0x10] sm:$0xff]
        %v167 = vld [vmem:[%s141 + $0x18] sm:$0xff]
        %v168 = vld [vmem:[%s141 + $0x20] sm:$0xff]
        %v169 = vld [vmem:[%s141 + $0x28] sm:$0xff]
        %v170 = vld [vmem:[%s141 + $0x30] sm:$0xff]
        %v171 = vld [vmem:[%s141 + $0x38] sm:$0xff]
        %v172 = vld [vmem:[%s141 + $0x40] sm:$0xff]
        %v173 = vld [vmem:[%s141 + $0x48] sm:$0xff]
        %v174 = vld [vmem:[%s141 + $0x50] sm:$0xff]
        %v175 = vld [vmem:[%s141 + $0x58] sm:$0xff]
        %v176 = vld [vmem:[%s141 + $0x60] sm:$0xff]
        %v177 = vld [vmem:[%s141 + $0x68] sm:$0xff]
        %v178 = vld [vmem:[%s141 + $0x70] sm:$0xff]
        %v179 = vld [vmem:[%s141 + $0x78] sm:$0xff]
        %180 = vadd.xlane.f32.xlu0 %v164
        %v181 = vpop.xlane.xlu0 %180
        %182 = vadd.xlane.f32.xlu0 %v165
        %v183 = vpop.xlane.xlu0 %182
        %184 = vadd.xlane.f32.xlu0 %v166
        %v185 = vpop.xlane.xlu0 %184
        %186 = vadd.xlane.f32.xlu0 %v167
        %v187 = vpop.xlane.xlu0 %186
        %188 = vadd.xlane.f32.xlu0 %v168
        %v189 = vpop.xlane.xlu0 %188
        %190 = vadd.xlane.f32.xlu0 %v169
        %v191 = vpop.xlane.xlu0 %190
        %192 = vadd.xlane.f32.xlu0 %v170
        %v193 = vpop.xlane.xlu0 %192
        %194 = vadd.xlane.f32.xlu0 %v171
        %v195 = vpop.xlane.xlu0 %194
        %196 = vadd.xlane.f32.xlu0 %v172
        %v197 = vpop.xlane.xlu0 %196
        %198 = vadd.xlane.f32.xlu0 %v173
        %v199 = vpop.xlane.xlu0 %198
        %200 = vadd.xlane.f32.xlu0 %v174
        %v201 = vpop.xlane.xlu0 %200
        %202 = vadd.xlane.f32.xlu0 %v175
        %v203 = vpop.xlane.xlu0 %202
        %204 = vadd.xlane.f32.xlu0 %v176
        %v205 = vpop.xlane.xlu0 %204
        %206 = vadd.xlane.f32.xlu0 %v177
        %v207 = vpop.xlane.xlu0 %206
        %208 = vadd.xlane.f32.xlu0 %v178
        %v209 = vpop.xlane.xlu0 %208
        %210 = vadd.xlane.f32.xlu0 %v179
        %v211 = vpop.xlane.xlu0 %210
        %v212 = vrcp.pop 128.0
        %v213 = vmul.f32 %v181, %v212
        %v214 = vmul.f32 %v183, %v212
        %v215 = vmul.f32 %v185, %v212
        %v216 = vmul.f32 %v187, %v212
        %v217 = vmul.f32 %v189, %v212
        %v218 = vmul.f32 %v191, %v212
        %v219 = vmul.f32 %v193, %v212
        %v220 = vmul.f32 %v195, %v212
        %v221 = vmul.f32 %v197, %v212
        %v222 = vmul.f32 %v199, %v212
        %v223 = vmul.f32 %v201, %v212
        %v224 = vmul.f32 %v203, %v212
        %v225 = vmul.f32 %v205, %v212
        %v226 = vmul.f32 %v207, %v212
        %v227 = vmul.f32 %v209, %v212
        %v228 = vmul.f32 %v211, %v212
        %v229 = vmul.f32 %v164, %v164
        %v230 = vmul.f32 %v165, %v165
        %v231 = vmul.f32 %v166, %v166
        %v232 = vmul.f32 %v167, %v167
        %v233 = vmul.f32 %v168, %v168
        %v234 = vmul.f32 %v169, %v169
        %v235 = vmul.f32 %v170, %v170
        %v236 = vmul.f32 %v171, %v171
        %v237 = vmul.f32 %v172, %v172
        %v238 = vmul.f32 %v173, %v173
        %v239 = vmul.f32 %v174, %v174
        %v240 = vmul.f32 %v175, %v175
        %v241 = vmul.f32 %v176, %v176
        %v242 = vmul.f32 %v177, %v177
        %v243 = vmul.f32 %v178, %v178
        %v244 = vmul.f32 %v179, %v179
        %245 = vadd.xlane.f32.xlu0 %v229
        %v246 = vpop.xlane.xlu0 %245
        %247 = vadd.xlane.f32.xlu0 %v230
        %v248 = vpop.xlane.xlu0 %247
        %249 = vadd.xlane.f32.xlu0 %v231
        %v250 = vpop.xlane.xlu0 %249
        %251 = vadd.xlane.f32.xlu0 %v232
        %v252 = vpop.xlane.xlu0 %251
        %253 = vadd.xlane.f32.xlu0 %v233
        %v254 = vpop.xlane.xlu0 %253
        %255 = vadd.xlane.f32.xlu0 %v234
        %v256 = vpop.xlane.xlu0 %255
        %257 = vadd.xlane.f32.xlu0 %v235
        %v258 = vpop.xlane.xlu0 %257
        %259 = vadd.xlane.f32.xlu0 %v236
        %v260 = vpop.xlane.xlu0 %259
        %261 = vadd.xlane.f32.xlu0 %v237
        %v262 = vpop.xlane.xlu0 %261
        %263 = vadd.xlane.f32.xlu0 %v238
        %v264 = vpop.xlane.xlu0 %263
        %265 = vadd.xlane.f32.xlu0 %v239
        %v266 = vpop.xlane.xlu0 %265
        %267 = vadd.xlane.f32.xlu0 %v240
        %v268 = vpop.xlane.xlu0 %267
        %269 = vadd.xlane.f32.xlu0 %v241
        %v270 = vpop.xlane.xlu0 %269
        %271 = vadd.xlane.f32.xlu0 %v242
        %v272 = vpop.xlane.xlu0 %271
        %273 = vadd.xlane.f32.xlu0 %v243
        %v274 = vpop.xlane.xlu0 %273
        %275 = vadd.xlane.f32.xlu0 %v244
        %v276 = vpop.xlane.xlu0 %275
        %v277 = vmul.f32 %v246, %v212
        %v278 = vmul.f32 %v248, %v212
        %v279 = vmul.f32 %v250, %v212
        %v280 = vmul.f32 %v252, %v212
        %v281 = vmul.f32 %v254, %v212
        %v282 = vmul.f32 %v256, %v212
        %v283 = vmul.f32 %v258, %v212
        %v284 = vmul.f32 %v260, %v212
        %v285 = vmul.f32 %v262, %v212
        %v286 = vmul.f32 %v264, %v212
        %v287 = vmul.f32 %v266, %v212
        %v288 = vmul.f32 %v268, %v212
        %v289 = vmul.f32 %v270, %v212
        %v290 = vmul.f32 %v272, %v212
        %v291 = vmul.f32 %v274, %v212
        %v292 = vmul.f32 %v276, %v212
        %v293 = vmul.f32 %v213, %v213
        %v294 = vmul.f32 %v214, %v214
        %v295 = vmul.f32 %v215, %v215
        %v296 = vmul.f32 %v216, %v216
        %v297 = vmul.f32 %v217, %v217
        %v298 = vmul.f32 %v218, %v218
        %v299 = vmul.f32 %v219, %v219
        %v300 = vmul.f32 %v220, %v220
        %v301 = vmul.f32 %v221, %v221
        %v302 = vmul.f32 %v222, %v222
        %v303 = vmul.f32 %v223, %v223
        %v304 = vmul.f32 %v224, %v224
        %v305 = vmul.f32 %v225, %v225
        %v306 = vmul.f32 %v226, %v226
        %v307 = vmul.f32 %v227, %v227
        %v308 = vmul.f32 %v228, %v228
        %v309 = vsub.f32 %v277, %v293
        %v310 = vsub.f32 %v278, %v294
        %v311 = vsub.f32 %v279, %v295
        %v312 = vsub.f32 %v280, %v296
        %v313 = vsub.f32 %v281, %v297
        %v314 = vsub.f32 %v282, %v298
        %v315 = vsub.f32 %v283, %v299
        %v316 = vsub.f32 %v284, %v300
        %v317 = vsub.f32 %v285, %v301
        %v318 = vsub.f32 %v286, %v302
        %v319 = vsub.f32 %v287, %v303
        %v320 = vsub.f32 %v288, %v304
        %v321 = vsub.f32 %v289, %v305
        %v322 = vsub.f32 %v290, %v306
        %v323 = vsub.f32 %v291, %v307
        %v324 = vsub.f32 %v292, %v308
        %v325 = vmax.f32 %v309, 0.0
        %v326 = vmax.f32 %v310, 0.0
        %v327 = vmax.f32 %v311, 0.0
        %v328 = vmax.f32 %v312, 0.0
        %v329 = vmax.f32 %v313, 0.0
        %v330 = vmax.f32 %v314, 0.0
        %v331 = vmax.f32 %v315, 0.0
        %v332 = vmax.f32 %v316, 0.0
        %v333 = vmax.f32 %v317, 0.0
        %v334 = vmax.f32 %v318, 0.0
        %v335 = vmax.f32 %v319, 0.0
        %v336 = vmax.f32 %v320, 0.0
        %v337 = vmax.f32 %v321, 0.0
        %v338 = vmax.f32 %v322, 0.0
        %v339 = vmax.f32 %v323, 0.0
        %v340 = vmax.f32 %v324, 0.0
        %v341 = vadd.f32 %v325, 1e-05
        %v342 = vadd.f32 %v326, 1e-05
        %v343 = vadd.f32 %v327, 1e-05
        %v344 = vadd.f32 %v328, 1e-05
        %v345 = vadd.f32 %v329, 1e-05
        %v346 = vadd.f32 %v330, 1e-05
        %v347 = vadd.f32 %v331, 1e-05
        %v348 = vadd.f32 %v332, 1e-05
        %v349 = vadd.f32 %v333, 1e-05
        %v350 = vadd.f32 %v334, 1e-05
        %v351 = vadd.f32 %v335, 1e-05
        %v352 = vadd.f32 %v336, 1e-05
        %v353 = vadd.f32 %v337, 1e-05
        %v354 = vadd.f32 %v338, 1e-05
        %v355 = vadd.f32 %v339, 1e-05
        %v356 = vadd.f32 %v340, 1e-05
        %v357 = vrsqrt.pop %v341
        %v358 = vrsqrt.pop %v342
        %v359 = vrsqrt.pop %v343
        %v360 = vrsqrt.pop %v344
        %v361 = vrsqrt.pop %v345
        %v362 = vrsqrt.pop %v346
        %v363 = vrsqrt.pop %v347
        %v364 = vrsqrt.pop %v348
        %v365 = vrsqrt.pop %v349
        %v366 = vrsqrt.pop %v350
        %v367 = vrsqrt.pop %v351
        %v368 = vrsqrt.pop %v352
        %v369 = vrsqrt.pop %v353
        %v370 = vrsqrt.pop %v354
        %v371 = vrsqrt.pop %v355
        %v372 = vrsqrt.pop %v356
        %v373 = vmul.f32 %v164, %v357
        %v374 = vmul.f32 %v165, %v358
        %v375 = vmul.f32 %v166, %v359
        %v376 = vmul.f32 %v167, %v360
        %v377 = vmul.f32 %v168, %v361
        %v378 = vmul.f32 %v169, %v362
        %v379 = vmul.f32 %v170, %v363
        %v380 = vmul.f32 %v171, %v364
        %v381 = vmul.f32 %v172, %v365
        %v382 = vmul.f32 %v173, %v366
        %v383 = vmul.f32 %v174, %v367
        %v384 = vmul.f32 %v175, %v368
        %v385 = vmul.f32 %v176, %v369
        %v386 = vmul.f32 %v177, %v370
        %v387 = vmul.f32 %v178, %v371
        %v388 = vmul.f32 %v179, %v372
        %v389 = vld [vmem:[%s1] sm:$0x1]
        %v391 = vlaneseq
        %v392 = vshrl.u32 %v391, 7
        %v393 = vsub.s32 0, %v392
        %v394 = vrot.slane %v389, %v393
        %v396 = vmul.f32 %v373, %v394
        %v397 = vmul.f32 %v374, %v394
        %v398 = vmul.f32 %v375, %v394
        %v399 = vmul.f32 %v376, %v394
        %v400 = vmul.f32 %v377, %v394
        %v401 = vmul.f32 %v378, %v394
        %v402 = vmul.f32 %v379, %v394
        %v403 = vmul.f32 %v380, %v394
        %v404 = vmul.f32 %v381, %v394
        %v405 = vmul.f32 %v382, %v394
        %v406 = vmul.f32 %v383, %v394
        %v407 = vmul.f32 %v384, %v394
        %v408 = vmul.f32 %v385, %v394
        %v409 = vmul.f32 %v386, %v394
        %v410 = vmul.f32 %v387, %v394
        %v411 = vmul.f32 %v388, %v394
        %412 = vst [vmem:[%s161] sm:$0xff] %v396
        %413 = vst [vmem:[%s161 + $0x8] sm:$0xff] %v397
        %414 = vst [vmem:[%s161 + $0x10] sm:$0xff] %v398
        %415 = vst [vmem:[%s161 + $0x18] sm:$0xff] %v399
        %416 = vst [vmem:[%s161 + $0x20] sm:$0xff] %v400
        %417 = vst [vmem:[%s161 + $0x28] sm:$0xff] %v401
        %418 = vst [vmem:[%s161 + $0x30] sm:$0xff] %v402
        %419 = vst [vmem:[%s161 + $0x38] sm:$0xff] %v403
        %420 = vst [vmem:[%s161 + $0x40] sm:$0xff] %v404
        %421 = vst [vmem:[%s161 + $0x48] sm:$0xff] %v405
        %422 = vst [vmem:[%s161 + $0x50] sm:$0xff] %v406
        %423 = vst [vmem:[%s161 + $0x58] sm:$0xff] %v407
        %424 = vst [vmem:[%s161 + $0x60] sm:$0xff] %v408
        %425 = vst [vmem:[%s161 + $0x68] sm:$0xff] %v409
        %426 = vst [vmem:[%s161 + $0x70] sm:$0xff] %v410
        %427 = vst [vmem:[%s161 + $0x78] sm:$0xff] %v411
        %s428 = sand.u32 %s74, 1
        %s429 = scalar_lea.sflag [#allocation4], %s428
        %s430 = sand.u32 %s74, 1
        %s431 = smul.addr %s430, 128
        %s432 = scalar_lea.vmem [#allocation5], %s431
        // Predicated region
        $region33: #{tpu_custom_call.1} parent=27 // pred_check
          %p433 = pneg %p84
        $region34: #{tpu_custom_call.1} parent=27 // pred_check_branch
          %435 = sbr.rel (%p433) target = $region36
        $region35: #{tpu_custom_call.1} parent=27 // pred_region
          %s436 = smul.u32 16, %s19
          %s438 = ssub.s32 2048, 2048
          %439 = vsyncadd %s429, %s438
          %s440 = smul.addr %s436, 128
          %s441 = scalar_lea.hbm %s2, %s440
          %s442 = sshll.u32 %s432, 4
          %s443 = int_to_ptr.vmem [resolvable:$true] %s442
          %448 = dma.vmem_to_hbm [thread:$0]  %s443, 2048, %s441, %s429, 128, 128, 8
        $region36: #{tpu_custom_call.1} parent=27 // pred_fallthru
          _
      $region28: #{tpu_custom_call.1} parent=5 // pred_fallthru
        _
      %p449 = scmp.le.s32.totalorder 2, %s14
      // Predicated region
      $region37: #{tpu_custom_call.1} parent=5 // pred_check
        %p450 = pneg %p449
      $region38: #{tpu_custom_call.1} parent=5 // pred_check_branch
        %452 = sbr.rel (%p450) target = $region40
      $region39: #{tpu_custom_call.1} parent=5 // pred_region
        %s453 = ssub.s32 %s14, 2
        // Predicated region
        $region41: #{tpu_custom_call.1} parent=39 // pred_check
          %p454 = pneg %p90
        $region42: #{tpu_custom_call.1} parent=39 // pred_check_branch
          %456 = sbr.rel (%p454) target = $region44
        $region43: #{tpu_custom_call.1} parent=39 // pred_region
          %s457 = sand.u32 %s75, 1
          %s458 = scalar_lea.sflag [#allocation4], %s457
          %s459 = sand.u32 %s75, 1
          %s460 = smul.addr %s459, 128
          %s461 = scalar_lea.vmem [#allocation5], %s460
          %462 = dma.done %s458, 2048
        $region44: #{tpu_custom_call.1} parent=39 // pred_fallthru
          _
      $region40: #{tpu_custom_call.1} parent=5 // pred_fallthru
        _
    $region6: #{tpu_custom_call.1} parent=1 // loop_footer
      %s18 = sadd.s32 1, %s14
    $region7: #{tpu_custom_call.1} parent=1 // loop_footer_branch
      %13 = sbr.rel target = $region3
    $region8: #{tpu_custom_call.1} parent=1 // loop_exit
      _
    %463 = vsyncpa [#allocation3], 1
    %s464 = scalar_lea.sflag [#allocation3], 1
    %465 = vsyncpa %s464, 1
    %466 = vsyncpa [#allocation4], 1
    %s467 = scalar_lea.sflag [#allocation4], 1
    %468 = vsyncpa %s467, 1

</llo_original>
